<compile_context>
chip_gen: v7x
topology: tpu7x:2x2x1
jax: 0.10.0
libtpu: 0.0.40
codegen_flags: <defaults>
</compile_context>

<pallas_src>
import functools

import jax
import jax.numpy as jnp
from jax.experimental import pallas as pl
from jax.experimental.pallas import tpu as pltpu


_SENTINEL = -1e30      # padded logit: max(x,0)=0 and log1p(exp(-|x|))=0 -> zero loss
_SLAB_ROWS = 512       # rows per in-kernel reduction slab (multiple of 8)


def _cdiv(a, b):
    return -(-a // b)


def _round_up(x, m):
    return _cdiv(x, m) * m


def _num_tensorcores():
    """2 TensorCores per chip on v7x, 1 on v5e/v6e."""
    try:
        kind = jax.devices()[0].device_kind.lower()
    except Exception:
        return 1
    return 2 if ("v7" in kind or "tpu7" in kind) else 1


def _bce_sum_kernel(x_ref, out_ref, *, slab_rows, n_slabs):
    """Accumulate sum over one batch tile of max(x,0) + log1p(exp(-|x|)).

    The '- x * one_hot(target)' term of BCE-with-logits is handled wrapper-side
    by a tiny gather, so the kernel streams logits only (no target tile at all).

    x_ref  : (tile_rows, L)  logits tile, lane dense (L = pack * num_classes)
    out_ref: (1, 8, L)       float32 per-core partial-sum accumulator (VMEM resident)
    """
    step = pl.program_id(1)

    @pl.when(step == 0)
    def _():
        out_ref[...] = jnp.zeros_like(out_ref)

    lanes = x_ref.shape[1]

    def body(s, acc):
        r0 = pl.multiple_of(s * slab_rows, slab_rows)
        x = x_ref[pl.ds(r0, slab_rows), :].astype(jnp.float32)
        # Numerically stable BCE-with-logits, one-hot term excluded (wrapper adds it).
        val = jnp.maximum(x, 0.0) + jnp.log1p(jnp.exp(-jnp.abs(x)))
        # Reduce only the leading (sublane-group) axis: plain VPU adds of (8, L)
        # vregs.  The single expensive cross-lane reduce happens once, in the wrapper.
        return acc + val.reshape(slab_rows // 8, 8, lanes).sum(axis=0)

    acc = jax.lax.fori_loop(
        0, n_slabs, body, jnp.zeros((8, lanes), jnp.float32), unroll=True)
    out_ref[0, :, :] += acc


def bce_with_logits_loss(logits, target, *, num_classes=64, max_tile_rows=4096):
    """logits: (N, num_classes); target: (N,) int -> scalar mean BCE-with-logits."""
    N, C = logits.shape
    assert C == num_classes

    # Pack rows so the kernel's last dim is 128-lane dense whenever C divides 128.
    pack = 128 // C if (C <= 128 and 128 % C == 0) else 1
    L = pack * C

    ncores = _num_tensorcores()
    slab_rows = _SLAB_ROWS

    n_pack = _cdiv(N, pack)
    tile_rows = min(max(max_tile_rows, slab_rows),
                    _round_up(_cdiv(n_pack, ncores), slab_rows))
    tile_rows = _round_up(tile_rows, slab_rows)   # defensive: multiple of slab (and 8)
    n_slabs = tile_rows // slab_rows
    steps = _cdiv(n_pack, ncores * tile_rows)
    n_pack_pad = ncores * tile_rows * steps
    n_pad = n_pack_pad * pack

    x = logits
    if n_pad > N:
        x = jnp.concatenate(
            [x, jnp.full((n_pad - N, C), _SENTINEL, dtype=x.dtype)], axis=0)
    x_packed = x.reshape(n_pack_pad, L)           # lane-dense logits, no target stream

    kernel = functools.partial(_bce_sum_kernel, slab_rows=slab_rows, n_slabs=n_slabs)

    partials = pl.pallas_call(
        kernel,
        out_shape=jax.ShapeDtypeStruct((ncores, 8, L), jnp.float32),
        grid_spec=pltpu.PrefetchScalarGridSpec(
            num_scalar_prefetch=0,
            grid=(ncores, steps),
            in_specs=[
                pl.BlockSpec((tile_rows, L), lambda c, i: (c * steps + i, 0)),
            ],
            # Same output block across the reduction axis -> VMEM-resident accumulator.
            out_specs=pl.BlockSpec((1, 8, L), lambda c, i: (c, 0, 0)),
        ),
        compiler_params=pltpu.CompilerParams(
            dimension_semantics=("parallel", "arbitrary"),
            vmem_limit_bytes=32 * 1024 * 1024),
        cost_estimate=pl.CostEstimate(
            flops=3 * n_pack_pad * L,
            transcendentals=2 * n_pack_pad * L,
            bytes_accessed=logits.dtype.itemsize * n_pack_pad * L + 4 * ncores * 8 * L),
    )(x_packed)

    # One-hot term done wrapper-side: sum_rows x[row, target[row]].
    t = target.astype(jnp.int32)
    pos_sum = jnp.sum(
        jnp.take_along_axis(logits.astype(jnp.float32), t[:, None], axis=1))

    # reduction='mean' divides by the total number of one-hot elements (N * C).
    return ((jnp.sum(partials) - pos_sum) / jnp.float32(N * C)).astype(jnp.float32)


if __name__ == "__main__":
    num_classes = 64
    N = 16

    key = jax.random.PRNGKey(0)
    k_logits, k_target = jax.random.split(key)
    logits = jax.random.normal(k_logits, (N, num_classes), dtype=jnp.float32)
    target = jax.random.randint(k_target, (N,), 0, num_classes, dtype=jnp.int32)

    loss = bce_with_logits_loss(logits, target, num_classes=num_classes)
    jax.block_until_ready(loss)

    # Pure-JAX reference (same stable formula as torch's BCEWithLogitsLoss).
    y_ref = jax.nn.one_hot(target, num_classes, dtype=jnp.float32)
    x = logits.astype(jnp.float32)
    ref = jnp.mean(jnp.maximum(x, 0.0) - x * y_ref + jnp.log1p(jnp.exp(-jnp.abs(x))))
    assert jnp.allclose(loss, ref, atol=1e-5, rtol=1e-5), (loss, ref)

    print("KERNEL_OK")
</pallas_src>

<mosaic_0001>
module attributes {stable_mosaic.version = 11 : i64} {
  func.func @_bce_sum_kernel(%arg0: i32, %arg1: i32, %arg2: memref<512x128xf32, #tpu.memory_space<vmem>>, %arg3: memref<1x8x128xf32, #tpu.memory_space<vmem>>) attributes {dimension_semantics = [#tpu.dimension_semantics<parallel>, #tpu.dimension_semantics<arbitrary>], iteration_bounds = array<i64: 1, 1>, scalar_prefetch = 0 : i64, scratch_operands = 0 : i64, tpu.core_type = #tpu.core_type<tc>, window_params = [{transform_indices = @transform_0, window_bounds = array<i64: 512, 128>}, {transform_indices = @transform_1, window_bounds = array<i64: 1, 8, 128>}]} {
    %c0_i32 = arith.constant 0 : i32
    %0 = arith.cmpi eq, %arg1, %c0_i32 : i32
    %1 = arith.extui %0 : i1 to i32
    %c0_i32_0 = arith.constant 0 : i32
    %2 = arith.cmpi ne, %1, %c0_i32_0 : i32
    scf.if %2 {
      %cst_11 = arith.constant 0.000000e+00 : f32
      %25 = vector.broadcast %cst_11 : f32 to vector<1x8x128xf32>
      %c0_12 = arith.constant 0 : index
      %c0_13 = arith.constant 0 : index
      %c0_14 = arith.constant 0 : index
      %26 = vector.load %arg3[%c0_12, %c0_13, %c0_14] : memref<1x8x128xf32, #tpu.memory_space<vmem>>, vector<1x8x128xf32>
      tpu.vector_store %arg3[%c0_12, %c0_13, %c0_14], %25 {strides = array<i32>} : memref<1x8x128xf32, #tpu.memory_space<vmem>>, vector<1x8x128xf32>,
    } else {
    }
    %cst = arith.constant 0.000000e+00 : f32
    %3 = vector.broadcast %cst : f32 to vector<8x128xf32>
    %c0_i32_1 = arith.constant 0 : i32
    %c512_i32 = arith.constant 512 : i32
    %4 = arith.muli %c0_i32_1, %c512_i32 : i32
    %5 = tpu.assume_multiple %4, 512 : i32
    %6 = arith.index_cast %5 : i32 to index
    %c0 = arith.constant 0 : index
    %7 = vector.load %arg2[%6, %c0] : memref<512x128xf32, #tpu.memory_space<vmem>>, vector<512x128xf32>
    %cst_2 = arith.constant 0.000000e+00 : f32
    %8 = vector.broadcast %cst_2 : f32 to vector<512x128xf32>
    %9 = arith.maximumf %7, %8 : vector<512x128xf32>
    %10 = math.absf %7 : vector<512x128xf32>
    %cst_3 = arith.constant 0.000000e+00 : f32
    %11 = vector.broadcast %cst_3 : f32 to vector<512x128xf32>
    %12 = arith.subf %11, %10 : vector<512x128xf32>
    %13 = math.exp %12 : vector<512x128xf32>
    %14 = math.log1p %13 : vector<512x128xf32>
    %15 = arith.addf %9, %14 : vector<512x128xf32>
    %16 = vector.shape_cast %15 : vector<512x128xf32> to vector<64x8x128xf32>
    %cst_4 = arith.constant dense<0.000000e+00> : vector<8x128xf32>
    %17 = vector.multi_reduction <add>, %16, %cst_4 [0] : vector<64x8x128xf32> to vector<8x128xf32>
    %18 = arith.addf %3, %17 : vector<8x128xf32>
    %c1_i32 = arith.constant 1 : i32
    %c0_5 = arith.constant 0 : index
    %c0_6 = arith.constant 0 : index
    %c0_7 = arith.constant 0 : index
    %19 = vector.load %arg3[%c0_5, %c0_6, %c0_7] : memref<1x8x128xf32, #tpu.memory_space<vmem>>, vector<1x8x128xf32>
    %20 = vector.shape_cast %19 : vector<1x8x128xf32> to vector<8x128xf32>
    %21 = arith.addf %20, %18 : vector<8x128xf32>
    %c0_8 = arith.constant 0 : index
    %c0_9 = arith.constant 0 : index
    %c0_10 = arith.constant 0 : index
    %22 = vector.load %arg3[%c0_8, %c0_9, %c0_10] : memref<1x8x128xf32, #tpu.memory_space<vmem>>, vector<1x8x128xf32>
    %23 = vector.shape_cast %22 : vector<1x8x128xf32> to vector<8x128xf32>
    %24 = vector.shape_cast %21 : vector<8x128xf32> to vector<1x8x128xf32>
    tpu.vector_store %arg3[%c0_8, %c0_9, %c0_10], %24 {strides = array<i32>} : memref<1x8x128xf32, #tpu.memory_space<vmem>>, vector<1x8x128xf32>,
    return
  }
  func.func @transform_0(%arg0: i32, %arg1: i32) -> (i32, i32) {
    %c1_i32 = arith.constant 1 : i32
    %0 = arith.muli %arg0, %c1_i32 : i32
    %1 = arith.addi %0, %arg1 : i32
    %c0_i32 = arith.constant 0 : i32
    %c0_i32_0 = arith.constant 0 : i32
    return %1, %c0_i32 : i32, i32
  }
  func.func @transform_1(%arg0: i32, %arg1: i32) -> (i32, i32, i32) {
    %c0_i32 = arith.constant 0 : i32
    %c0_i32_0 = arith.constant 0 : i32
    %c0_i32_1 = arith.constant 0 : i32
    return %arg0, %c0_i32, %c0_i32_0 : i32, i32, i32
  }
}

</mosaic_0001>

<llo_original>
// kernel: tpu_custom_call.1
$region0: #{tpu_custom_call.1}
  #allocation0 [shape = 'u32[]', space=smem, size = 0x4, offset = 0x4, fixed_abs, tag = 'smem constant byte address 0x4 - core index']
  #allocation1 [shape = 'u32[144,128]{1,0:T(1,128)}', space=vmem, size = 0x12000, scoped, tag = 'internal scratch']
  %s0 = inlined_call_operand.hbm [shape: f32[512,128], index: 0, kind: input, shape index: {}]
  %s1 = inlined_call_operand.hbm [shape: f32[1,8,128], index: 1, kind: output, shape index: {}]
  %s2 = sld [smem:[#allocation0]]
  $region22: #{tpu_custom_call.1} parent=0
    _
  %s4 = ssub.s32 1, %s2
  %s5 = scalar_select 0, %s4, %s2
  $region1: #{tpu_custom_call.1} parent=0
    #allocation2 [shape = 'u8[262144]{0}', space=vmem, size = 0x40000, scoped, tag = 'input window, operand 0, single buffered']
    #allocation3 [shape = 's32[1]{0}', space=sflag, size = 0x4, scoped, tag = 'scoped memory for tpu_custom_call.1']
    #allocation4 [shape = 's32[1]{0}', space=sflag, size = 0x4, scoped, tag = 'scoped memory for tpu_custom_call.1']
    #allocation5 [shape = 'u8[4096]{0}', space=vmem, size = 0x1000, scoped, tag = 'output window, operand 0, single buffered']
    %6 = vsyncpa [#allocation3], 0
    %7 = vsyncpa [#allocation4], 0
    // Predicated region
    $region2: #{tpu_custom_call.1} parent=1 // pred_check
      _
    $region3: #{tpu_custom_call.1} parent=1 // pred_check_branch
      %9 = sbr.rel (0) target = $region5
    $region4: #{tpu_custom_call.1} parent=1 // pred_region
      %s10 = sadd.s32 0, 0
      %s11 = smul.u32 64, %s10
      %s13 = ssub.s32 8192, 8192
      %14 = vsyncadd [#allocation3], %s13
      %s15 = smul.addr %s11, 128
      %s16 = scalar_lea.hbm %s0, %s15
      %s17 = sshll.u32 [#allocation2], 4
      %s18 = int_to_ptr.vmem [resolvable:$true] %s17
      %23 = dma.hbm_to_vmem [thread:$0]  %s16, 8192, %s18, [#allocation3], 128, 128, 8
    $region5: #{tpu_custom_call.1} parent=1 // pred_fallthru
      _
    // Predicated region
    $region6: #{tpu_custom_call.1} parent=1 // pred_check
      _
    $region7: #{tpu_custom_call.1} parent=1 // pred_check_branch
      %25 = sbr.rel (0) target = $region9
    $region8: #{tpu_custom_call.1} parent=1 // pred_region
      %26 = dma.done [#allocation3], 8192
    $region9: #{tpu_custom_call.1} parent=1 // pred_fallthru
      _
    %s27 = sadd.s32 0, 0
    %s28 = smul.u32 64, %s27
    %p29 = scmp.eq.s32.totalorder 0, 0
    // Predicated region
    $region10: #{tpu_custom_call.1} parent=1 // pred_check
      %p30 = pneg %p29
    $region11: #{tpu_custom_call.1} parent=1 // pred_check_branch
      %32 = sbr.rel (%p30) target = $region13
    $region12: #{tpu_custom_call.1} parent=1 // pred_region
      %33 = vst [vmem:[#allocation5] sm:$0xff] 0.0
    $region13: #{tpu_custom_call.1} parent=1 // pred_fallthru
      _
    %v34 = vld [vmem:[#allocation2] sm:$0xff]
    %v35 = vld [vmem:[#allocation2 + $0x8] sm:$0xff]
    %v36 = vld [vmem:[#allocation2 + $0x10] sm:$0xff]
    %v37 = vld [vmem:[#allocation2 + $0x18] sm:$0xff]
    %v38 = vld [vmem:[#allocation2 + $0x20] sm:$0xff]
    %v39 = vld [vmem:[#allocation2 + $0x28] sm:$0xff]
    %v40 = vld [vmem:[#allocation2 + $0x30] sm:$0xff]
    %v41 = vld [vmem:[#allocation2 + $0x38] sm:$0xff]
    %v42 = vld [vmem:[#allocation2 + $0x40] sm:$0xff]
    %v43 = vld [vmem:[#allocation2 + $0x48] sm:$0xff]
    %v44 = vld [vmem:[#allocation2 + $0x50] sm:$0xff]
    %v45 = vld [vmem:[#allocation2 + $0x58] sm:$0xff]
    %v46 = vld [vmem:[#allocation2 + $0x60] sm:$0xff]
    %v47 = vld [vmem:[#allocation2 + $0x68] sm:$0xff]
    %v48 = vld [vmem:[#allocation2 + $0x70] sm:$0xff]
    %v49 = vld [vmem:[#allocation2 + $0x78] sm:$0xff]
    %v50 = vld [vmem:[#allocation2 + $0x80] sm:$0xff]
    %v51 = vld [vmem:[#allocation2 + $0x88] sm:$0xff]
    %v52 = vld [vmem:[#allocation2 + $0x90] sm:$0xff]
    %v53 = vld [vmem:[#allocation2 + $0x98] sm:$0xff]
    %v54 = vld [vmem:[#allocation2 + $0xa0] sm:$0xff]
    %v55 = vld [vmem:[#allocation2 + $0xa8] sm:$0xff]
    %v56 = vld [vmem:[#allocation2 + $0xb0] sm:$0xff]
    %v57 = vld [vmem:[#allocation2 + $0xb8] sm:$0xff]
    %v58 = vld [vmem:[#allocation2 + $0xc0] sm:$0xff]
    %v59 = vld [vmem:[#allocation2 + $0xc8] sm:$0xff]
    %v60 = vld [vmem:[#allocation2 + $0xd0] sm:$0xff]
    %v61 = vld [vmem:[#allocation2 + $0xd8] sm:$0xff]
    %v62 = vld [vmem:[#allocation2 + $0xe0] sm:$0xff]
    %v63 = vld [vmem:[#allocation2 + $0xe8] sm:$0xff]
    %v64 = vld [vmem:[#allocation2 + $0xf0] sm:$0xff]
    %v65 = vld [vmem:[#allocation2 + $0xf8] sm:$0xff]
    %v66 = vld [vmem:[#allocation2 + $0x100] sm:$0xff]
    %v67 = vld [vmem:[#allocation2 + $0x108] sm:$0xff]
    %v68 = vld [vmem:[#allocation2 + $0x110] sm:$0xff]
    %v69 = vld [vmem:[#allocation2 + $0x118] sm:$0xff]
    %v70 = vld [vmem:[#allocation2 + $0x120] sm:$0xff]
    %v71 = vld [vmem:[#allocation2 + $0x128] sm:$0xff]
    %v72 = vld [vmem:[#allocation2 + $0x130] sm:$0xff]
    %v73 = vld [vmem:[#allocation2 + $0x138] sm:$0xff]
    %v74 = vld [vmem:[#allocation2 + $0x140] sm:$0xff]
    %v75 = vld [vmem:[#allocation2 + $0x148] sm:$0xff]
    %v76 = vld [vmem:[#allocation2 + $0x150] sm:$0xff]
    %v77 = vld [vmem:[#allocation2 + $0x158] sm:$0xff]
    %v78 = vld [vmem:[#allocation2 + $0x160] sm:$0xff]
    %v79 = vld [vmem:[#allocation2 + $0x168] sm:$0xff]
    %v80 = vld [vmem:[#allocation2 + $0x170] sm:$0xff]
    %v81 = vld [vmem:[#allocation2 + $0x178] sm:$0xff]
    %v82 = vld [vmem:[#allocation2 + $0x180] sm:$0xff]
    %v83 = vld [vmem:[#allocation2 + $0x188] sm:$0xff]
    %v84 = vld [vmem:[#allocation2 + $0x190] sm:$0xff]
    %v85 = vld [vmem:[#allocation2 + $0x198] sm:$0xff]
    %v86 = vld [vmem:[#allocation2 + $0x1a0] sm:$0xff]
    %v87 = vld [vmem:[#allocation2 + $0x1a8] sm:$0xff]
    %v88 = vld [vmem:[#allocation2 + $0x1b0] sm:$0xff]
    %v89 = vld [vmem:[#allocation2 + $0x1b8] sm:$0xff]
    %v90 = vld [vmem:[#allocation2 + $0x1c0] sm:$0xff]
    %v91 = vld [vmem:[#allocation2 + $0x1c8] sm:$0xff]
    %v92 = vld [vmem:[#allocation2 + $0x1d0] sm:$0xff]
    %v93 = vld [vmem:[#allocation2 + $0x1d8] sm:$0xff]
    %v94 = vld [vmem:[#allocation2 + $0x1e0] sm:$0xff]
    %v95 = vld [vmem:[#allocation2 + $0x1e8] sm:$0xff]
    %v96 = vld [vmem:[#allocation2 + $0x1f0] sm:$0xff]
    %v97 = vld [vmem:[#allocation2 + $0x1f8] sm:$0xff]
    %v98 = vmax.f32 %v34, 0.0
    %v99 = vmax.f32 %v35, 0.0
    %v100 = vmax.f32 %v36, 0.0
    %v101 = vmax.f32 %v37, 0.0
    %v102 = vmax.f32 %v38, 0.0
    %v103 = vmax.f32 %v39, 0.0
    %v104 = vmax.f32 %v40, 0.0
    %v105 = vmax.f32 %v41, 0.0
    %v106 = vmax.f32 %v42, 0.0
    %v107 = vmax.f32 %v43, 0.0
    %v108 = vmax.f32 %v44, 0.0
    %v109 = vmax.f32 %v45, 0.0
    %v110 = vmax.f32 %v46, 0.0
    %v111 = vmax.f32 %v47, 0.0
    %v112 = vmax.f32 %v48, 0.0
    %v113 = vmax.f32 %v49, 0.0
    %v114 = vmax.f32 %v50, 0.0
    %v115 = vmax.f32 %v51, 0.0
    %v116 = vmax.f32 %v52, 0.0
    %v117 = vmax.f32 %v53, 0.0
    %v118 = vmax.f32 %v54, 0.0
    %v119 = vmax.f32 %v55, 0.0
    %v120 = vmax.f32 %v56, 0.0
    %v121 = vmax.f32 %v57, 0.0
    %v122 = vmax.f32 %v58, 0.0
    %v123 = vmax.f32 %v59, 0.0
    %v124 = vmax.f32 %v60, 0.0
    %v125 = vmax.f32 %v61, 0.0
    %v126 = vmax.f32 %v62, 0.0
    %v127 = vmax.f32 %v63, 0.0
    %v128 = vmax.f32 %v64, 0.0
    %v129 = vmax.f32 %v65, 0.0
    %v130 = vmax.f32 %v66, 0.0
    %v131 = vmax.f32 %v67, 0.0
    %v132 = vmax.f32 %v68, 0.0
    %v133 = vmax.f32 %v69, 0.0
    %v134 = vmax.f32 %v70, 0.0
    %v135 = vmax.f32 %v71, 0.0
    %v136 = vmax.f32 %v72, 0.0
    %v137 = vmax.f32 %v73, 0.0
    %v138 = vmax.f32 %v74, 0.0
    %v139 = vmax.f32 %v75, 0.0
    %v140 = vmax.f32 %v76, 0.0
    %v141 = vmax.f32 %v77, 0.0
    %v142 = vmax.f32 %v78, 0.0
    %v143 = vmax.f32 %v79, 0.0
    %v144 = vmax.f32 %v80, 0.0
    %v145 = vmax.f32 %v81, 0.0
    %v146 = vmax.f32 %v82, 0.0
    %v147 = vmax.f32 %v83, 0.0
    %v148 = vmax.f32 %v84, 0.0
    %v149 = vmax.f32 %v85, 0.0
    %v150 = vmax.f32 %v86, 0.0
    %v151 = vmax.f32 %v87, 0.0
    %v152 = vmax.f32 %v88, 0.0
    %v153 = vmax.f32 %v89, 0.0
    %v154 = vmax.f32 %v90, 0.0
    %v155 = vmax.f32 %v91, 0.0
    %v156 = vmax.f32 %v92, 0.0
    %v157 = vmax.f32 %v93, 0.0
    %v158 = vmax.f32 %v94, 0.0
    %v159 = vmax.f32 %v95, 0.0
    %v160 = vmax.f32 %v96, 0.0
    %v161 = vmax.f32 %v97, 0.0
    %v162 = vand.u32 2147483647, %v34
    %v163 = vand.u32 2147483647, %v35
    %v164 = vand.u32 2147483647, %v36
    %v165 = vand.u32 2147483647, %v37
    %v166 = vand.u32 2147483647, %v38
    %v167 = vand.u32 2147483647, %v39
    %v168 = vand.u32 2147483647, %v40
    %v169 = vand.u32 2147483647, %v41
    %v170 = vand.u32 2147483647, %v42
    %v171 = vand.u32 2147483647, %v43
    %v172 = vand.u32 2147483647, %v44
    %v173 = vand.u32 2147483647, %v45
    %v174 = vand.u32 2147483647, %v46
    %v175 = vand.u32 2147483647, %v47
    %v176 = vand.u32 2147483647, %v48
    %v177 = vand.u32 2147483647, %v49
    %v178 = vand.u32 2147483647, %v50
    %v179 = vand.u32 2147483647, %v51
    %v180 = vand.u32 2147483647, %v52
    %v181 = vand.u32 2147483647, %v53
    %v182 = vand.u32 2147483647, %v54
    %v183 = vand.u32 2147483647, %v55
    %v184 = vand.u32 2147483647, %v56
    %v185 = vand.u32 2147483647, %v57
    %v186 = vand.u32 2147483647, %v58
    %v187 = vand.u32 2147483647, %v59
    %v188 = vand.u32 2147483647, %v60
    %v189 = vand.u32 2147483647, %v61
    %v190 = vand.u32 2147483647, %v62
    %v191 = vand.u32 2147483647, %v63
    %v192 = vand.u32 2147483647, %v64
    %v193 = vand.u32 2147483647, %v65
    %v194 = vand.u32 2147483647, %v66
    %v195 = vand.u32 2147483647, %v67
    %v196 = vand.u32 2147483647, %v68
    %v197 = vand.u32 2147483647, %v69
    %v198 = vand.u32 2147483647, %v70
    %v199 = vand.u32 2147483647, %v71
    %v200 = vand.u32 2147483647, %v72
    %v201 = vand.u32 2147483647, %v73
    %v202 = vand.u32 2147483647, %v74
    %v203 = vand.u32 2147483647, %v75
    %v204 = vand.u32 2147483647, %v76
    %v205 = vand.u32 2147483647, %v77
    %v206 = vand.u32 2147483647, %v78
    %v207 = vand.u32 2147483647, %v79
    %v208 = vand.u32 2147483647, %v80
    %v209 = vand.u32 2147483647, %v81
    %v210 = vand.u32 2147483647, %v82
    %v211 = vand.u32 2147483647, %v83
    %v212 = vand.u32 2147483647, %v84
    %v213 = vand.u32 2147483647, %v85
    %v214 = vand.u32 2147483647, %v86
    %v215 = vand.u32 2147483647, %v87
    %v216 = vand.u32 2147483647, %v88
    %v217 = vand.u32 2147483647, %v89
    %v218 = vand.u32 2147483647, %v90
    %v219 = vand.u32 2147483647, %v91
    %v220 = vand.u32 2147483647, %v92
    %v221 = vand.u32 2147483647, %v93
    %v222 = vand.u32 2147483647, %v94
    %v223 = vand.u32 2147483647, %v95
    %v224 = vand.u32 2147483647, %v96
    %v225 = vand.u32 2147483647, %v97
    %v226 = vsub.f32 0.0, %v162
    %v227 = vsub.f32 0.0, %v163
    %v228 = vsub.f32 0.0, %v164
    %v229 = vsub.f32 0.0, %v165
    %v230 = vsub.f32 0.0, %v166
    %v231 = vsub.f32 0.0, %v167
    %v232 = vsub.f32 0.0, %v168
    %v233 = vsub.f32 0.0, %v169
    %v234 = vsub.f32 0.0, %v170
    %v235 = vsub.f32 0.0, %v171
    %v236 = vsub.f32 0.0, %v172
    %v237 = vsub.f32 0.0, %v173
    %v238 = vsub.f32 0.0, %v174
    %v239 = vsub.f32 0.0, %v175
    %v240 = vsub.f32 0.0, %v176
    %v241 = vsub.f32 0.0, %v177
    %v242 = vsub.f32 0.0, %v178
    %v243 = vsub.f32 0.0, %v179
    %v244 = vsub.f32 0.0, %v180
    %v245 = vsub.f32 0.0, %v181
    %v246 = vsub.f32 0.0, %v182
    %v247 = vsub.f32 0.0, %v183
    %v248 = vsub.f32 0.0, %v184
    %v249 = vsub.f32 0.0, %v185
    %v250 = vsub.f32 0.0, %v186
    %v251 = vsub.f32 0.0, %v187
    %v252 = vsub.f32 0.0, %v188
    %v253 = vsub.f32 0.0, %v189
    %v254 = vsub.f32 0.0, %v190
    %v255 = vsub.f32 0.0, %v191
    %v256 = vsub.f32 0.0, %v192
    %v257 = vsub.f32 0.0, %v193
    %v258 = vsub.f32 0.0, %v194
    %v259 = vsub.f32 0.0, %v195
    %v260 = vsub.f32 0.0, %v196
    %v261 = vsub.f32 0.0, %v197
    %v262 = vsub.f32 0.0, %v198
    %v263 = vsub.f32 0.0, %v199
    %v264 = vsub.f32 0.0, %v200
    %v265 = vsub.f32 0.0, %v201
    %v266 = vsub.f32 0.0, %v202
    %v267 = vsub.f32 0.0, %v203
    %v268 = vsub.f32 0.0, %v204
    %v269 = vsub.f32 0.0, %v205
    %v270 = vsub.f32 0.0, %v206
    %v271 = vsub.f32 0.0, %v207
    %v272 = vsub.f32 0.0, %v208
    %v273 = vsub.f32 0.0, %v209
    %v274 = vsub.f32 0.0, %v210
    %v275 = vsub.f32 0.0, %v211
    %v276 = vsub.f32 0.0, %v212
    %v277 = vsub.f32 0.0, %v213
    %v278 = vsub.f32 0.0, %v214
    %v279 = vsub.f32 0.0, %v215
    %v280 = vsub.f32 0.0, %v216
    %v281 = vsub.f32 0.0, %v217
    %v282 = vsub.f32 0.0, %v218
    %v283 = vsub.f32 0.0, %v219
    %v284 = vsub.f32 0.0, %v220
    %v285 = vsub.f32 0.0, %v221
    %v286 = vsub.f32 0.0, %v222
    %v287 = vsub.f32 0.0, %v223
    %v288 = vsub.f32 0.0, %v224
    %v289 = vsub.f32 0.0, %v225
    %v290 = vmul.f32 %v226, 1.442695
    %v291 = vpow.pop %v290
    %v292 = vmul.f32 %v227, 1.442695
    %v293 = vpow.pop %v292
    %v294 = vmul.f32 %v228, 1.442695
    %v295 = vpow.pop %v294
    %v296 = vmul.f32 %v229, 1.442695
    %v297 = vpow.pop %v296
    %v298 = vmul.f32 %v230, 1.442695
    %v299 = vpow.pop %v298
    %v300 = vmul.f32 %v231, 1.442695
    %v301 = vpow.pop %v300
    %v302 = vmul.f32 %v232, 1.442695
    %v303 = vpow.pop %v302
    %v304 = vmul.f32 %v233, 1.442695
    %v305 = vpow.pop %v304
    %v306 = vmul.f32 %v234, 1.442695
    %v307 = vpow.pop %v306
    %v308 = vmul.f32 %v235, 1.442695
    %v309 = vpow.pop %v308
    %v310 = vmul.f32 %v236, 1.442695
    %v311 = vpow.pop %v310
    %v312 = vmul.f32 %v237, 1.442695
    %v313 = vpow.pop %v312
    %v314 = vmul.f32 %v238, 1.442695
    %v315 = vpow.pop %v314
    %v316 = vmul.f32 %v239, 1.442695
    %v317 = vpow.pop %v316
    %v318 = vmul.f32 %v240, 1.442695
    %v319 = vpow.pop %v318
    %v320 = vmul.f32 %v241, 1.442695
    %v321 = vpow.pop %v320
    %v322 = vmul.f32 %v242, 1.442695
    %v323 = vpow.pop %v322
    %v324 = vmul.f32 %v243, 1.442695
    %v325 = vpow.pop %v324
    %v326 = vmul.f32 %v244, 1.442695
    %v327 = vpow.pop %v326
    %v328 = vmul.f32 %v245, 1.442695
    %v329 = vpow.pop %v328
    %v330 = vmul.f32 %v246, 1.442695
    %v331 = vpow.pop %v330
    %v332 = vmul.f32 %v247, 1.442695
    %v333 = vpow.pop %v332
    %v334 = vmul.f32 %v248, 1.442695
    %v335 = vpow.pop %v334
    %v336 = vmul.f32 %v249, 1.442695
    %v337 = vpow.pop %v336
    %v338 = vmul.f32 %v250, 1.442695
    %v339 = vpow.pop %v338
    %v340 = vmul.f32 %v251, 1.442695
    %v341 = vpow.pop %v340
    %v342 = vmul.f32 %v252, 1.442695
    %v343 = vpow.pop %v342
    %v344 = vmul.f32 %v253, 1.442695
    %v345 = vpow.pop %v344
    %v346 = vmul.f32 %v254, 1.442695
    %v347 = vpow.pop %v346
    %v348 = vmul.f32 %v255, 1.442695
    %v349 = vpow.pop %v348
    %v350 = vmul.f32 %v256, 1.442695
    %v351 = vpow.pop %v350
    %v352 = vmul.f32 %v257, 1.442695
    %v353 = vpow.pop %v352
    %v354 = vmul.f32 %v258, 1.442695
    %v355 = vpow.pop %v354
    %v356 = vmul.f32 %v259, 1.442695
    %v357 = vpow.pop %v356
    %v358 = vmul.f32 %v260, 1.442695
    %v359 = vpow.pop %v358
    %v360 = vmul.f32 %v261, 1.442695
    %v361 = vpow.pop %v360
    %v362 = vmul.f32 %v262, 1.442695
    %v363 = vpow.pop %v362
    %v364 = vmul.f32 %v263, 1.442695
    %v365 = vpow.pop %v364
    %v366 = vmul.f32 %v264, 1.442695
    %v367 = vpow.pop %v366
    %v368 = vmul.f32 %v265, 1.442695
    %v369 = vpow.pop %v368
    %v370 = vmul.f32 %v266, 1.442695
    %v371 = vpow.pop %v370
    %v372 = vmul.f32 %v267, 1.442695
    %v373 = vpow.pop %v372
    %v374 = vmul.f32 %v268, 1.442695
    %v375 = vpow.pop %v374
    %v376 = vmul.f32 %v269, 1.442695
    %v377 = vpow.pop %v376
    %v378 = vmul.f32 %v270, 1.442695
    %v379 = vpow.pop %v378
    %v380 = vmul.f32 %v271, 1.442695
    %v381 = vpow.pop %v380
    %v382 = vmul.f32 %v272, 1.442695
    %v383 = vpow.pop %v382
    %v384 = vmul.f32 %v273, 1.442695
    %v385 = vpow.pop %v384
    %v386 = vmul.f32 %v274, 1.442695
    %v387 = vpow.pop %v386
    %v388 = vmul.f32 %v275, 1.442695
    %v389 = vpow.pop %v388
    %v390 = vmul.f32 %v276, 1.442695
    %v391 = vpow.pop %v390
    %v392 = vmul.f32 %v277, 1.442695
    %v393 = vpow.pop %v392
    %v394 = vmul.f32 %v278, 1.442695
    %v395 = vpow.pop %v394
    %v396 = vmul.f32 %v279, 1.442695
    %v397 = vpow.pop %v396
    %v398 = vmul.f32 %v280, 1.442695
    %v399 = vpow.pop %v398
    %v400 = vmul.f32 %v281, 1.442695
    %v401 = vpow.pop %v400
    %v402 = vmul.f32 %v282, 1.442695
    %v403 = vpow.pop %v402
    %v404 = vmul.f32 %v283, 1.442695
    %v405 = vpow.pop %v404
    %v406 = vmul.f32 %v284, 1.442695
    %v407 = vpow.pop %v406
    %v408 = vmul.f32 %v285, 1.442695
    %v409 = vpow.pop %v408
    %v410 = vmul.f32 %v286, 1.442695
    %v411 = vpow.pop %v410
    %v412 = vmul.f32 %v287, 1.442695
    %v413 = vpow.pop %v412
    %v414 = vmul.f32 %v288, 1.442695
    %v415 = vpow.pop %v414
    %v416 = vmul.f32 %v289, 1.442695
    %v417 = vpow.pop %v416
    %v418 = vadd.f32 %v291, 1.0
    %v419 = vlog2.pop %v418
    %v420 = vmul.f32 %v419, 0.6931472
    %v421 = vmul.f32 -0.5, %v291
    %v422 = vadd.f32 %v421, 1.0
    %v423 = vmul.f32 %v422, %v291
    %v424 = vand.u32 2147483647, %v291
    %vm425 = vcmp.lt.f32.partialorder %v424, 0.0004427343
    %v426 = vsel %vm425, %v423, %v420
    %v427 = vadd.f32 %v293, 1.0
    %v428 = vlog2.pop %v427
    %v429 = vmul.f32 %v428, 0.6931472
    %v430 = vmul.f32 -0.5, %v293
    %v431 = vadd.f32 %v430, 1.0
    %v432 = vmul.f32 %v431, %v293
    %v433 = vand.u32 2147483647, %v293
    %vm434 = vcmp.lt.f32.partialorder %v433, 0.0004427343
    %v435 = vsel %vm434, %v432, %v429
    %v436 = vadd.f32 %v295, 1.0
    %v437 = vlog2.pop %v436
    %v438 = vmul.f32 %v437, 0.6931472
    %v439 = vmul.f32 -0.5, %v295
    %v440 = vadd.f32 %v439, 1.0
    %v441 = vmul.f32 %v440, %v295
    %v442 = vand.u32 2147483647, %v295
    %vm443 = vcmp.lt.f32.partialorder %v442, 0.0004427343
    %v444 = vsel %vm443, %v441, %v438
    %v445 = vadd.f32 %v297, 1.0
    %v446 = vlog2.pop %v445
    %v447 = vmul.f32 %v446, 0.6931472
    %v448 = vmul.f32 -0.5, %v297
    %v449 = vadd.f32 %v448, 1.0
    %v450 = vmul.f32 %v449, %v297
    %v451 = vand.u32 2147483647, %v297
    %vm452 = vcmp.lt.f32.partialorder %v451, 0.0004427343
    %v453 = vsel %vm452, %v450, %v447
    %v454 = vadd.f32 %v299, 1.0
    %v455 = vlog2.pop %v454
    %v456 = vmul.f32 %v455, 0.6931472
    %v457 = vmul.f32 -0.5, %v299
    %v458 = vadd.f32 %v457, 1.0
    %v459 = vmul.f32 %v458, %v299
    %v460 = vand.u32 2147483647, %v299
    %vm461 = vcmp.lt.f32.partialorder %v460, 0.0004427343
    %v462 = vsel %vm461, %v459, %v456
    %v463 = vadd.f32 %v301, 1.0
    %v464 = vlog2.pop %v463
    %v465 = vmul.f32 %v464, 0.6931472
    %v466 = vmul.f32 -0.5, %v301
    %v467 = vadd.f32 %v466, 1.0
    %v468 = vmul.f32 %v467, %v301
    %v469 = vand.u32 2147483647, %v301
    %vm470 = vcmp.lt.f32.partialorder %v469, 0.0004427343
    %v471 = vsel %vm470, %v468, %v465
    %v472 = vadd.f32 %v303, 1.0
    %v473 = vlog2.pop %v472
    %v474 = vmul.f32 %v473, 0.6931472
    %v475 = vmul.f32 -0.5, %v303
    %v476 = vadd.f32 %v475, 1.0
    %v477 = vmul.f32 %v476, %v303
    %v478 = vand.u32 2147483647, %v303
    %vm479 = vcmp.lt.f32.partialorder %v478, 0.0004427343
    %v480 = vsel %vm479, %v477, %v474
    %v481 = vadd.f32 %v305, 1.0
    %v482 = vlog2.pop %v481
    %v483 = vmul.f32 %v482, 0.6931472
    %v484 = vmul.f32 -0.5, %v305
    %v485 = vadd.f32 %v484, 1.0
    %v486 = vmul.f32 %v485, %v305
    %v487 = vand.u32 2147483647, %v305
    %vm488 = vcmp.lt.f32.partialorder %v487, 0.0004427343
    %v489 = vsel %vm488, %v486, %v483
    %v490 = vadd.f32 %v307, 1.0
    %v491 = vlog2.pop %v490
    %v492 = vmul.f32 %v491, 0.6931472
    %v493 = vmul.f32 -0.5, %v307
    %v494 = vadd.f32 %v493, 1.0
    %v495 = vmul.f32 %v494, %v307
    %v496 = vand.u32 2147483647, %v307
    %vm497 = vcmp.lt.f32.partialorder %v496, 0.0004427343
    %v498 = vsel %vm497, %v495, %v492
    %v499 = vadd.f32 %v309, 1.0
    %v500 = vlog2.pop %v499
    %v501 = vmul.f32 %v500, 0.6931472
    %v502 = vmul.f32 -0.5, %v309
    %v503 = vadd.f32 %v502, 1.0
    %v504 = vmul.f32 %v503, %v309
    %v505 = vand.u32 2147483647, %v309
    %vm506 = vcmp.lt.f32.partialorder %v505, 0.0004427343
    %v507 = vsel %vm506, %v504, %v501
    %v508 = vadd.f32 %v311, 1.0
    %v509 = vlog2.pop %v508
    %v510 = vmul.f32 %v509, 0.6931472
    %v511 = vmul.f32 -0.5, %v311
    %v512 = vadd.f32 %v511, 1.0
    %v513 = vmul.f32 %v512, %v311
    %v514 = vand.u32 2147483647, %v311
    %vm515 = vcmp.lt.f32.partialorder %v514, 0.0004427343
    %v516 = vsel %vm515, %v513, %v510
    %v517 = vadd.f32 %v313, 1.0
    %v518 = vlog2.pop %v517
    %v519 = vmul.f32 %v518, 0.6931472
    %v520 = vmul.f32 -0.5, %v313
    %v521 = vadd.f32 %v520, 1.0
    %v522 = vmul.f32 %v521, %v313
    %v523 = vand.u32 2147483647, %v313
    %vm524 = vcmp.lt.f32.partialorder %v523, 0.0004427343
    %v525 = vsel %vm524, %v522, %v519
    %v526 = vadd.f32 %v315, 1.0
    %v527 = vlog2.pop %v526
    %v528 = vmul.f32 %v527, 0.6931472
    %v529 = vmul.f32 -0.5, %v315
    %v530 = vadd.f32 %v529, 1.0
    %v531 = vmul.f32 %v530, %v315
    %v532 = vand.u32 2147483647, %v315
    %vm533 = vcmp.lt.f32.partialorder %v532, 0.0004427343
    %v534 = vsel %vm533, %v531, %v528
    %v535 = vadd.f32 %v317, 1.0
    %v536 = vlog2.pop %v535
    %v537 = vmul.f32 %v536, 0.6931472
    %v538 = vmul.f32 -0.5, %v317
    %v539 = vadd.f32 %v538, 1.0
    %v540 = vmul.f32 %v539, %v317
    %v541 = vand.u32 2147483647, %v317
    %vm542 = vcmp.lt.f32.partialorder %v541, 0.0004427343
    %v543 = vsel %vm542, %v540, %v537
    %v544 = vadd.f32 %v319, 1.0
    %v545 = vlog2.pop %v544
    %v546 = vmul.f32 %v545, 0.6931472
    %v547 = vmul.f32 -0.5, %v319
    %v548 = vadd.f32 %v547, 1.0
    %v549 = vmul.f32 %v548, %v319
    %v550 = vand.u32 2147483647, %v319
    %vm551 = vcmp.lt.f32.partialorder %v550, 0.0004427343
    %v552 = vsel %vm551, %v549, %v546
    %v553 = vadd.f32 %v321, 1.0
    %v554 = vlog2.pop %v553
    %v555 = vmul.f32 %v554, 0.6931472
    %v556 = vmul.f32 -0.5, %v321
    %v557 = vadd.f32 %v556, 1.0
    %v558 = vmul.f32 %v557, %v321
    %v559 = vand.u32 2147483647, %v321
    %vm560 = vcmp.lt.f32.partialorder %v559, 0.0004427343
    %v561 = vsel %vm560, %v558, %v555
    %v562 = vadd.f32 %v323, 1.0
    %v563 = vlog2.pop %v562
    %v564 = vmul.f32 %v563, 0.6931472
    %v565 = vmul.f32 -0.5, %v323
    %v566 = vadd.f32 %v565, 1.0
    %v567 = vmul.f32 %v566, %v323
    %v568 = vand.u32 2147483647, %v323
    %vm569 = vcmp.lt.f32.partialorder %v568, 0.0004427343
    %v570 = vsel %vm569, %v567, %v564
    %v571 = vadd.f32 %v325, 1.0
    %v572 = vlog2.pop %v571
    %v573 = vmul.f32 %v572, 0.6931472
    %v574 = vmul.f32 -0.5, %v325
    %v575 = vadd.f32 %v574, 1.0
    %v576 = vmul.f32 %v575, %v325
    %v577 = vand.u32 2147483647, %v325
    %vm578 = vcmp.lt.f32.partialorder %v577, 0.0004427343
    %v579 = vsel %vm578, %v576, %v573
    %v580 = vadd.f32 %v327, 1.0
    %v581 = vlog2.pop %v580
    %v582 = vmul.f32 %v581, 0.6931472
    %v583 = vmul.f32 -0.5, %v327
    %v584 = vadd.f32 %v583, 1.0
    %v585 = vmul.f32 %v584, %v327
    %v586 = vand.u32 2147483647, %v327
    %vm587 = vcmp.lt.f32.partialorder %v586, 0.0004427343
    %v588 = vsel %vm587, %v585, %v582
    %v589 = vadd.f32 %v329, 1.0
    %v590 = vlog2.pop %v589
    %v591 = vmul.f32 %v590, 0.6931472
    %v592 = vmul.f32 -0.5, %v329
    %v593 = vadd.f32 %v592, 1.0
    %v594 = vmul.f32 %v593, %v329
    %v595 = vand.u32 2147483647, %v329
    %vm596 = vcmp.lt.f32.partialorder %v595, 0.0004427343
    %v597 = vsel %vm596, %v594, %v591
    %v598 = vadd.f32 %v331, 1.0
    %v599 = vlog2.pop %v598
    %v600 = vmul.f32 %v599, 0.6931472
    %v601 = vmul.f32 -0.5, %v331
    %v602 = vadd.f32 %v601, 1.0
    %v603 = vmul.f32 %v602, %v331
    %v604 = vand.u32 2147483647, %v331
    %vm605 = vcmp.lt.f32.partialorder %v604, 0.0004427343
    %v606 = vsel %vm605, %v603, %v600
    %v607 = vadd.f32 %v333, 1.0
    %v608 = vlog2.pop %v607
    %v609 = vmul.f32 %v608, 0.6931472
    %v610 = vmul.f32 -0.5, %v333
    %v611 = vadd.f32 %v610, 1.0
    %v612 = vmul.f32 %v611, %v333
    %v613 = vand.u32 2147483647, %v333
    %vm614 = vcmp.lt.f32.partialorder %v613, 0.0004427343
    %v615 = vsel %vm614, %v612, %v609
    %v616 = vadd.f32 %v335, 1.0
    %v617 = vlog2.pop %v616
    %v618 = vmul.f32 %v617, 0.6931472
    %v619 = vmul.f32 -0.5, %v335
    %v620 = vadd.f32 %v619, 1.0
    %v621 = vmul.f32 %v620, %v335
    %v622 = vand.u32 2147483647, %v335
    %vm623 = vcmp.lt.f32.partialorder %v622, 0.0004427343
    %v624 = vsel %vm623, %v621, %v618
    %v625 = vadd.f32 %v337, 1.0
    %v626 = vlog2.pop %v625
    %v627 = vmul.f32 %v626, 0.6931472
    %v628 = vmul.f32 -0.5, %v337
    %v629 = vadd.f32 %v628, 1.0
    %v630 = vmul.f32 %v629, %v337
    %v631 = vand.u32 2147483647, %v337
    %vm632 = vcmp.lt.f32.partialorder %v631, 0.0004427343
    %v633 = vsel %vm632, %v630, %v627
    %v634 = vadd.f32 %v339, 1.0
    %v635 = vlog2.pop %v634
    %v636 = vmul.f32 %v635, 0.6931472
    %v637 = vmul.f32 -0.5, %v339
    %v638 = vadd.f32 %v637, 1.0
    %v639 = vmul.f32 %v638, %v339
    %v640 = vand.u32 2147483647, %v339
    %vm641 = vcmp.lt.f32.partialorder %v640, 0.0004427343
    %v642 = vsel %vm641, %v639, %v636
    %v643 = vadd.f32 %v341, 1.0
    %v644 = vlog2.pop %v643
    %v645 = vmul.f32 %v644, 0.6931472
    %v646 = vmul.f32 -0.5, %v341
    %v647 = vadd.f32 %v646, 1.0
    %v648 = vmul.f32 %v647, %v341
    %v649 = vand.u32 2147483647, %v341
    %vm650 = vcmp.lt.f32.partialorder %v649, 0.0004427343
    %v651 = vsel %vm650, %v648, %v645
    %v652 = vadd.f32 %v343, 1.0
    %v653 = vlog2.pop %v652
    %v654 = vmul.f32 %v653, 0.6931472
    %v655 = vmul.f32 -0.5, %v343
    %v656 = vadd.f32 %v655, 1.0
    %v657 = vmul.f32 %v656, %v343
    %v658 = vand.u32 2147483647, %v343
    %vm659 = vcmp.lt.f32.partialorder %v658, 0.0004427343
    %v660 = vsel %vm659, %v657, %v654
    %v661 = vadd.f32 %v345, 1.0
    %v662 = vlog2.pop %v661
    %v663 = vmul.f32 %v662, 0.6931472
    %v664 = vmul.f32 -0.5, %v345
    %v665 = vadd.f32 %v664, 1.0
    %v666 = vmul.f32 %v665, %v345
    %v667 = vand.u32 2147483647, %v345
    %vm668 = vcmp.lt.f32.partialorder %v667, 0.0004427343
    %v669 = vsel %vm668, %v666, %v663
    %v670 = vadd.f32 %v347, 1.0
    %v671 = vlog2.pop %v670
    %v672 = vmul.f32 %v671, 0.6931472
    %v673 = vmul.f32 -0.5, %v347
    %v674 = vadd.f32 %v673, 1.0
    %v675 = vmul.f32 %v674, %v347
    %v676 = vand.u32 2147483647, %v347
    %vm677 = vcmp.lt.f32.partialorder %v676, 0.0004427343
    %v678 = vsel %vm677, %v675, %v672
    %v679 = vadd.f32 %v349, 1.0
    %v680 = vlog2.pop %v679
    %v681 = vmul.f32 %v680, 0.6931472
    %v682 = vmul.f32 -0.5, %v349
    %v683 = vadd.f32 %v682, 1.0
    %v684 = vmul.f32 %v683, %v349
    %v685 = vand.u32 2147483647, %v349
    %vm686 = vcmp.lt.f32.partialorder %v685, 0.0004427343
    %v687 = vsel %vm686, %v684, %v681
    %v688 = vadd.f32 %v351, 1.0
    %v689 = vlog2.pop %v688
    %v690 = vmul.f32 %v689, 0.6931472
    %v691 = vmul.f32 -0.5, %v351
    %v692 = vadd.f32 %v691, 1.0
    %v693 = vmul.f32 %v692, %v351
    %v694 = vand.u32 2147483647, %v351
    %vm695 = vcmp.lt.f32.partialorder %v694, 0.0004427343
    %v696 = vsel %vm695, %v693, %v690
    %v697 = vadd.f32 %v353, 1.0
    %v698 = vlog2.pop %v697
    %v699 = vmul.f32 %v698, 0.6931472
    %v700 = vmul.f32 -0.5, %v353
    %v701 = vadd.f32 %v700, 1.0
    %v702 = vmul.f32 %v701, %v353
    %v703 = vand.u32 2147483647, %v353
    %vm704 = vcmp.lt.f32.partialorder %v703, 0.0004427343
    %v705 = vsel %vm704, %v702, %v699
    %v706 = vadd.f32 %v355, 1.0
    %v707 = vlog2.pop %v706
    %v708 = vmul.f32 %v707, 0.6931472
    %v709 = vmul.f32 -0.5, %v355
    %v710 = vadd.f32 %v709, 1.0
    %v711 = vmul.f32 %v710, %v355
    %v712 = vand.u32 2147483647, %v355
    %vm713 = vcmp.lt.f32.partialorder %v712, 0.0004427343
    %v714 = vsel %vm713, %v711, %v708
    %v715 = vadd.f32 %v357, 1.0
    %v716 = vlog2.pop %v715
    %v717 = vmul.f32 %v716, 0.6931472
    %v718 = vmul.f32 -0.5, %v357
    %v719 = vadd.f32 %v718, 1.0
    %v720 = vmul.f32 %v719, %v357
    %v721 = vand.u32 2147483647, %v357
    %vm722 = vcmp.lt.f32.partialorder %v721, 0.0004427343
    %v723 = vsel %vm722, %v720, %v717
    %v724 = vadd.f32 %v359, 1.0
    %v725 = vlog2.pop %v724
    %v726 = vmul.f32 %v725, 0.6931472
    %v727 = vmul.f32 -0.5, %v359
    %v728 = vadd.f32 %v727, 1.0
    %v729 = vmul.f32 %v728, %v359
    %v730 = vand.u32 2147483647, %v359
    %vm731 = vcmp.lt.f32.partialorder %v730, 0.0004427343
    %v732 = vsel %vm731, %v729, %v726
    %v733 = vadd.f32 %v361, 1.0
    %v734 = vlog2.pop %v733
    %v735 = vmul.f32 %v734, 0.6931472
    %v736 = vmul.f32 -0.5, %v361
    %v737 = vadd.f32 %v736, 1.0
    %v738 = vmul.f32 %v737, %v361
    %v739 = vand.u32 2147483647, %v361
    %vm740 = vcmp.lt.f32.partialorder %v739, 0.0004427343
    %v741 = vsel %vm740, %v738, %v735
    %v742 = vadd.f32 %v363, 1.0
    %v743 = vlog2.pop %v742
    %v744 = vmul.f32 %v743, 0.6931472
    %v745 = vmul.f32 -0.5, %v363
    %v746 = vadd.f32 %v745, 1.0
    %v747 = vmul.f32 %v746, %v363
    %v748 = vand.u32 2147483647, %v363
    %vm749 = vcmp.lt.f32.partialorder %v748, 0.0004427343
    %v750 = vsel %vm749, %v747, %v744
    %v751 = vadd.f32 %v365, 1.0
    %v752 = vlog2.pop %v751
    %v753 = vmul.f32 %v752, 0.6931472
    %v754 = vmul.f32 -0.5, %v365
    %v755 = vadd.f32 %v754, 1.0
    %v756 = vmul.f32 %v755, %v365
    %v757 = vand.u32 2147483647, %v365
    %vm758 = vcmp.lt.f32.partialorder %v757, 0.0004427343
    %v759 = vsel %vm758, %v756, %v753
    %v760 = vadd.f32 %v367, 1.0
    %v761 = vlog2.pop %v760
    %v762 = vmul.f32 %v761, 0.6931472
    %v763 = vmul.f32 -0.5, %v367
    %v764 = vadd.f32 %v763, 1.0
    %v765 = vmul.f32 %v764, %v367
    %v766 = vand.u32 2147483647, %v367
    %vm767 = vcmp.lt.f32.partialorder %v766, 0.0004427343
    %v768 = vsel %vm767, %v765, %v762
    %v769 = vadd.f32 %v369, 1.0
    %v770 = vlog2.pop %v769
    %v771 = vmul.f32 %v770, 0.6931472
    %v772 = vmul.f32 -0.5, %v369
    %v773 = vadd.f32 %v772, 1.0
    %v774 = vmul.f32 %v773, %v369
    %v775 = vand.u32 2147483647, %v369
    %vm776 = vcmp.lt.f32.partialorder %v775, 0.0004427343
    %v777 = vsel %vm776, %v774, %v771
    %v778 = vadd.f32 %v371, 1.0
    %v779 = vlog2.pop %v778
    %v780 = vmul.f32 %v779, 0.6931472
    %v781 = vmul.f32 -0.5, %v371
    %v782 = vadd.f32 %v781, 1.0
    %v783 = vmul.f32 %v782, %v371
    %v784 = vand.u32 2147483647, %v371
    %vm785 = vcmp.lt.f32.partialorder %v784, 0.0004427343
    %v786 = vsel %vm785, %v783, %v780
    %v787 = vadd.f32 %v373, 1.0
    %v788 = vlog2.pop %v787
    %v789 = vmul.f32 %v788, 0.6931472
    %v790 = vmul.f32 -0.5, %v373
    %v791 = vadd.f32 %v790, 1.0
    %v792 = vmul.f32 %v791, %v373
    %v793 = vand.u32 2147483647, %v373
    %vm794 = vcmp.lt.f32.partialorder %v793, 0.0004427343
    %v795 = vsel %vm794, %v792, %v789
    %v796 = vadd.f32 %v375, 1.0
    %v797 = vlog2.pop %v796
    %v798 = vmul.f32 %v797, 0.6931472
    %v799 = vmul.f32 -0.5, %v375
    %v800 = vadd.f32 %v799, 1.0
    %v801 = vmul.f32 %v800, %v375
    %v802 = vand.u32 2147483647, %v375
    %vm803 = vcmp.lt.f32.partialorder %v802, 0.0004427343
    %v804 = vsel %vm803, %v801, %v798
    %v805 = vadd.f32 %v377, 1.0
    %v806 = vlog2.pop %v805
    %v807 = vmul.f32 %v806, 0.6931472
    %v808 = vmul.f32 -0.5, %v377
    %v809 = vadd.f32 %v808, 1.0
    %v810 = vmul.f32 %v809, %v377
    %v811 = vand.u32 2147483647, %v377
    %vm812 = vcmp.lt.f32.partialorder %v811, 0.0004427343
    %v813 = vsel %vm812, %v810, %v807
    %v814 = vadd.f32 %v379, 1.0
    %v815 = vlog2.pop %v814
    %v816 = vmul.f32 %v815, 0.6931472
    %v817 = vmul.f32 -0.5, %v379
    %v818 = vadd.f32 %v817, 1.0
    %v819 = vmul.f32 %v818, %v379
    %v820 = vand.u32 2147483647, %v379
    %vm821 = vcmp.lt.f32.partialorder %v820, 0.0004427343
    %v822 = vsel %vm821, %v819, %v816
    %v823 = vadd.f32 %v381, 1.0
    %v824 = vlog2.pop %v823
    %v825 = vmul.f32 %v824, 0.6931472
    %v826 = vmul.f32 -0.5, %v381
    %v827 = vadd.f32 %v826, 1.0
    %v828 = vmul.f32 %v827, %v381
    %v829 = vand.u32 2147483647, %v381
    %vm830 = vcmp.lt.f32.partialorder %v829, 0.0004427343
    %v831 = vsel %vm830, %v828, %v825
    %v832 = vadd.f32 %v383, 1.0
    %v833 = vlog2.pop %v832
    %v834 = vmul.f32 %v833, 0.6931472
    %v835 = vmul.f32 -0.5, %v383
    %v836 = vadd.f32 %v835, 1.0
    %v837 = vmul.f32 %v836, %v383
    %v838 = vand.u32 2147483647, %v383
    %vm839 = vcmp.lt.f32.partialorder %v838, 0.0004427343
    %v840 = vsel %vm839, %v837, %v834
    %v841 = vadd.f32 %v385, 1.0
    %v842 = vlog2.pop %v841
    %v843 = vmul.f32 %v842, 0.6931472
    %v844 = vmul.f32 -0.5, %v385
    %v845 = vadd.f32 %v844, 1.0
    %v846 = vmul.f32 %v845, %v385
    %v847 = vand.u32 2147483647, %v385
    %vm848 = vcmp.lt.f32.partialorder %v847, 0.0004427343
    %v849 = vsel %vm848, %v846, %v843
    %v850 = vadd.f32 %v387, 1.0
    %v851 = vlog2.pop %v850
    %v852 = vmul.f32 %v851, 0.6931472
    %v853 = vmul.f32 -0.5, %v387
    %v854 = vadd.f32 %v853, 1.0
    %v855 = vmul.f32 %v854, %v387
    %v856 = vand.u32 2147483647, %v387
    %vm857 = vcmp.lt.f32.partialorder %v856, 0.0004427343
    %v858 = vsel %vm857, %v855, %v852
    %v859 = vadd.f32 %v389, 1.0
    %v860 = vlog2.pop %v859
    %v861 = vmul.f32 %v860, 0.6931472
    %v862 = vmul.f32 -0.5, %v389
    %v863 = vadd.f32 %v862, 1.0
    %v864 = vmul.f32 %v863, %v389
    %v865 = vand.u32 2147483647, %v389
    %vm866 = vcmp.lt.f32.partialorder %v865, 0.0004427343
    %v867 = vsel %vm866, %v864, %v861
    %v868 = vadd.f32 %v391, 1.0
    %v869 = vlog2.pop %v868
    %v870 = vmul.f32 %v869, 0.6931472
    %v871 = vmul.f32 -0.5, %v391
    %v872 = vadd.f32 %v871, 1.0
    %v873 = vmul.f32 %v872, %v391
    %v874 = vand.u32 2147483647, %v391
    %vm875 = vcmp.lt.f32.partialorder %v874, 0.0004427343
    %v876 = vsel %vm875, %v873, %v870
    %v877 = vadd.f32 %v393, 1.0
    %v878 = vlog2.pop %v877
    %v879 = vmul.f32 %v878, 0.6931472
    %v880 = vmul.f32 -0.5, %v393
    %v881 = vadd.f32 %v880, 1.0
    %v882 = vmul.f32 %v881, %v393
    %v883 = vand.u32 2147483647, %v393
    %vm884 = vcmp.lt.f32.partialorder %v883, 0.0004427343
    %v885 = vsel %vm884, %v882, %v879
    %v886 = vadd.f32 %v395, 1.0
    %v887 = vlog2.pop %v886
    %v888 = vmul.f32 %v887, 0.6931472
    %v889 = vmul.f32 -0.5, %v395
    %v890 = vadd.f32 %v889, 1.0
    %v891 = vmul.f32 %v890, %v395
    %v892 = vand.u32 2147483647, %v395
    %vm893 = vcmp.lt.f32.partialorder %v892, 0.0004427343
    %v894 = vsel %vm893, %v891, %v888
    %v895 = vadd.f32 %v397, 1.0
    %v896 = vlog2.pop %v895
    %v897 = vmul.f32 %v896, 0.6931472
    %v898 = vmul.f32 -0.5, %v397
    %v899 = vadd.f32 %v898, 1.0
    %v900 = vmul.f32 %v899, %v397
    %v901 = vand.u32 2147483647, %v397
    %vm902 = vcmp.lt.f32.partialorder %v901, 0.0004427343
    %v903 = vsel %vm902, %v900, %v897
    %v904 = vadd.f32 %v399, 1.0
    %v905 = vlog2.pop %v904
    %v906 = vmul.f32 %v905, 0.6931472
    %v907 = vmul.f32 -0.5, %v399
    %v908 = vadd.f32 %v907, 1.0
    %v909 = vmul.f32 %v908, %v399
    %v910 = vand.u32 2147483647, %v399
    %vm911 = vcmp.lt.f32.partialorder %v910, 0.0004427343
    %v912 = vsel %vm911, %v909, %v906
    %v913 = vadd.f32 %v401, 1.0
    %v914 = vlog2.pop %v913
    %v915 = vmul.f32 %v914, 0.6931472
    %v916 = vmul.f32 -0.5, %v401
    %v917 = vadd.f32 %v916, 1.0
    %v918 = vmul.f32 %v917, %v401
    %v919 = vand.u32 2147483647, %v401
    %vm920 = vcmp.lt.f32.partialorder %v919, 0.0004427343
    %v921 = vsel %vm920, %v918, %v915
    %v922 = vadd.f32 %v403, 1.0
    %v923 = vlog2.pop %v922
    %v924 = vmul.f32 %v923, 0.6931472
    %v925 = vmul.f32 -0.5, %v403
    %v926 = vadd.f32 %v925, 1.0
    %v927 = vmul.f32 %v926, %v403
    %v928 = vand.u32 2147483647, %v403
    %vm929 = vcmp.lt.f32.partialorder %v928, 0.0004427343
    %v930 = vsel %vm929, %v927, %v924
    %v931 = vadd.f32 %v405, 1.0
    %v932 = vlog2.pop %v931
    %v933 = vmul.f32 %v932, 0.6931472
    %v934 = vmul.f32 -0.5, %v405
    %v935 = vadd.f32 %v934, 1.0
    %v936 = vmul.f32 %v935, %v405
    %v937 = vand.u32 2147483647, %v405
    %vm938 = vcmp.lt.f32.partialorder %v937, 0.0004427343
    %v939 = vsel %vm938, %v936, %v933
    %v940 = vadd.f32 %v407, 1.0
    %v941 = vlog2.pop %v940
    %v942 = vmul.f32 %v941, 0.6931472
    %v943 = vmul.f32 -0.5, %v407
    %v944 = vadd.f32 %v943, 1.0
    %v945 = vmul.f32 %v944, %v407
    %v946 = vand.u32 2147483647, %v407
    %vm947 = vcmp.lt.f32.partialorder %v946, 0.0004427343
    %v948 = vsel %vm947, %v945, %v942
    %v949 = vadd.f32 %v409, 1.0
    %v950 = vlog2.pop %v949
    %v951 = vmul.f32 %v950, 0.6931472
    %v952 = vmul.f32 -0.5, %v409
    %v953 = vadd.f32 %v952, 1.0
    %v954 = vmul.f32 %v953, %v409
    %v955 = vand.u32 2147483647, %v409
    %vm956 = vcmp.lt.f32.partialorder %v955, 0.0004427343
    %v957 = vsel %vm956, %v954, %v951
    %v958 = vadd.f32 %v411, 1.0
    %v959 = vlog2.pop %v958
    %v960 = vmul.f32 %v959, 0.6931472
    %v961 = vmul.f32 -0.5, %v411
    %v962 = vadd.f32 %v961, 1.0
    %v963 = vmul.f32 %v962, %v411
    %v964 = vand.u32 2147483647, %v411
    %vm965 = vcmp.lt.f32.partialorder %v964, 0.0004427343
    %v966 = vsel %vm965, %v963, %v960
    %v967 = vadd.f32 %v413, 1.0
    %v968 = vlog2.pop %v967
    %v969 = vmul.f32 %v968, 0.6931472
    %v970 = vmul.f32 -0.5, %v413
    %v971 = vadd.f32 %v970, 1.0
    %v972 = vmul.f32 %v971, %v413
    %v973 = vand.u32 2147483647, %v413
    %vm974 = vcmp.lt.f32.partialorder %v973, 0.0004427343
    %v975 = vsel %vm974, %v972, %v969
    %v976 = vadd.f32 %v415, 1.0
    %v977 = vlog2.pop %v976
    %v978 = vmul.f32 %v977, 0.6931472
    %v979 = vmul.f32 -0.5, %v415
    %v980 = vadd.f32 %v979, 1.0
    %v981 = vmul.f32 %v980, %v415
    %v982 = vand.u32 2147483647, %v415
    %vm983 = vcmp.lt.f32.partialorder %v982, 0.0004427343
    %v984 = vsel %vm983, %v981, %v978
    %v985 = vadd.f32 %v417, 1.0
    %v986 = vlog2.pop %v985
    %v987 = vmul.f32 %v986, 0.6931472
    %v988 = vmul.f32 -0.5, %v417
    %v989 = vadd.f32 %v988, 1.0
    %v990 = vmul.f32 %v989, %v417
    %v991 = vand.u32 2147483647, %v417
    %vm992 = vcmp.lt.f32.partialorder %v991, 0.0004427343
    %v993 = vsel %vm992, %v990, %v987
    %v994 = vadd.f32 %v98, %v426
    %v995 = vadd.f32 %v99, %v435
    %v996 = vadd.f32 %v100, %v444
    %v997 = vadd.f32 %v101, %v453
    %v998 = vadd.f32 %v102, %v462
    %v999 = vadd.f32 %v103, %v471
    %v1000 = vadd.f32 %v104, %v480
    %v1001 = vadd.f32 %v105, %v489
    %v1002 = vadd.f32 %v106, %v498
    %v1003 = vadd.f32 %v107, %v507
    %v1004 = vadd.f32 %v108, %v516
    %v1005 = vadd.f32 %v109, %v525
    %v1006 = vadd.f32 %v110, %v534
    %v1007 = vadd.f32 %v111, %v543
    %v1008 = vadd.f32 %v112, %v552
    %v1009 = vadd.f32 %v113, %v561
    %v1010 = vadd.f32 %v114, %v570
    %v1011 = vadd.f32 %v115, %v579
    %v1012 = vadd.f32 %v116, %v588
    %v1013 = vadd.f32 %v117, %v597
    %v1014 = vadd.f32 %v118, %v606
    %v1015 = vadd.f32 %v119, %v615
    %v1016 = vadd.f32 %v120, %v624
    %v1017 = vadd.f32 %v121, %v633
    %v1018 = vadd.f32 %v122, %v642
    %v1019 = vadd.f32 %v123, %v651
    %v1020 = vadd.f32 %v124, %v660
    %v1021 = vadd.f32 %v125, %v669
    %v1022 = vadd.f32 %v126, %v678
    %v1023 = vadd.f32 %v127, %v687
    %v1024 = vadd.f32 %v128, %v696
    %v1025 = vadd.f32 %v129, %v705
    %v1026 = vadd.f32 %v130, %v714
    %v1027 = vadd.f32 %v131, %v723
    %v1028 = vadd.f32 %v132, %v732
    %v1029 = vadd.f32 %v133, %v741
    %v1030 = vadd.f32 %v134, %v750
    %v1031 = vadd.f32 %v135, %v759
    %v1032 = vadd.f32 %v136, %v768
    %v1033 = vadd.f32 %v137, %v777
    %v1034 = vadd.f32 %v138, %v786
    %v1035 = vadd.f32 %v139, %v795
    %v1036 = vadd.f32 %v140, %v804
    %v1037 = vadd.f32 %v141, %v813
    %v1038 = vadd.f32 %v142, %v822
    %v1039 = vadd.f32 %v143, %v831
    %v1040 = vadd.f32 %v144, %v840
    %v1041 = vadd.f32 %v145, %v849
    %v1042 = vadd.f32 %v146, %v858
    %v1043 = vadd.f32 %v147, %v867
    %v1044 = vadd.f32 %v148, %v876
    %v1045 = vadd.f32 %v149, %v885
    %v1046 = vadd.f32 %v150, %v894
    %v1047 = vadd.f32 %v151, %v903
    %v1048 = vadd.f32 %v152, %v912
    %v1049 = vadd.f32 %v153, %v921
    %v1050 = vadd.f32 %v154, %v930
    %v1051 = vadd.f32 %v155, %v939
    %v1052 = vadd.f32 %v156, %v948
    %v1053 = vadd.f32 %v157, %v957
    %v1054 = vadd.f32 %v158, %v966
    %v1055 = vadd.f32 %v159, %v975
    %v1056 = vadd.f32 %v160, %v984
    %v1057 = vadd.f32 %v161, %v993
    %v1058 = vadd.f32 %v994, %v995
    %v1059 = vadd.f32 %v1058, %v996
    %v1060 = vadd.f32 %v1059, %v997
    %v1061 = vadd.f32 %v1060, %v998
    %v1062 = vadd.f32 %v1061, %v999
    %v1063 = vadd.f32 %v1062, %v1000
    %v1064 = vadd.f32 %v1063, %v1001
    %v1065 = vadd.f32 %v1064, %v1002
    %v1066 = vadd.f32 %v1065, %v1003
    %v1067 = vadd.f32 %v1066, %v1004
    %v1068 = vadd.f32 %v1067, %v1005
    %v1069 = vadd.f32 %v1068, %v1006
    %v1070 = vadd.f32 %v1069, %v1007
    %v1071 = vadd.f32 %v1070, %v1008
    %v1072 = vadd.f32 %v1071, %v1009
    %v1073 = vadd.f32 %v1072, %v1010
    %v1074 = vadd.f32 %v1073, %v1011
    %v1075 = vadd.f32 %v1074, %v1012
    %v1076 = vadd.f32 %v1075, %v1013
    %v1077 = vadd.f32 %v1076, %v1014
    %v1078 = vadd.f32 %v1077, %v1015
    %v1079 = vadd.f32 %v1078, %v1016
    %v1080 = vadd.f32 %v1079, %v1017
    %v1081 = vadd.f32 %v1080, %v1018
    %v1082 = vadd.f32 %v1081, %v1019
    %v1083 = vadd.f32 %v1082, %v1020
    %v1084 = vadd.f32 %v1083, %v1021
    %v1085 = vadd.f32 %v1084, %v1022
    %v1086 = vadd.f32 %v1085, %v1023
    %v1087 = vadd.f32 %v1086, %v1024
    %v1088 = vadd.f32 %v1087, %v1025
    %v1089 = vadd.f32 %v1088, %v1026
    %v1090 = vadd.f32 %v1089, %v1027
    %v1091 = vadd.f32 %v1090, %v1028
    %v1092 = vadd.f32 %v1091, %v1029
    %v1093 = vadd.f32 %v1092, %v1030
    %v1094 = vadd.f32 %v1093, %v1031
    %v1095 = vadd.f32 %v1094, %v1032
    %v1096 = vadd.f32 %v1095, %v1033
    %v1097 = vadd.f32 %v1096, %v1034
    %v1098 = vadd.f32 %v1097, %v1035
    %v1099 = vadd.f32 %v1098, %v1036
    %v1100 = vadd.f32 %v1099, %v1037
    %v1101 = vadd.f32 %v1100, %v1038
    %v1102 = vadd.f32 %v1101, %v1039
    %v1103 = vadd.f32 %v1102, %v1040
    %v1104 = vadd.f32 %v1103, %v1041
    %v1105 = vadd.f32 %v1104, %v1042
    %v1106 = vadd.f32 %v1105, %v1043
    %v1107 = vadd.f32 %v1106, %v1044
    %v1108 = vadd.f32 %v1107, %v1045
    %v1109 = vadd.f32 %v1108, %v1046
    %v1110 = vadd.f32 %v1109, %v1047
    %v1111 = vadd.f32 %v1110, %v1048
    %v1112 = vadd.f32 %v1111, %v1049
    %v1113 = vadd.f32 %v1112, %v1050
    %v1114 = vadd.f32 %v1113, %v1051
    %v1115 = vadd.f32 %v1114, %v1052
    %v1116 = vadd.f32 %v1115, %v1053
    %v1117 = vadd.f32 %v1116, %v1054
    %v1118 = vadd.f32 %v1117, %v1055
    %v1119 = vadd.f32 %v1118, %v1056
    %v1120 = vadd.f32 %v1119, %v1057
    %v1121 = vadd.f32 %v1120, 0.0
    %v1122 = vld [vmem:[#allocation5] sm:$0xff]
    %v1123 = vadd.f32 %v1122, %v1121
    %1124 = vst [vmem:[#allocation5] sm:$0xff] %v1123
    // Predicated region
    $region14: #{tpu_custom_call.1} parent=1 // pred_check
      _
    $region15: #{tpu_custom_call.1} parent=1 // pred_check_branch
      %1126 = sbr.rel (0) target = $region17
    $region16: #{tpu_custom_call.1} parent=1 // pred_region
      %s1128 = ssub.s32 128, 128
      %1129 = vsyncadd [#allocation4], %s1128
      %s1131 = sshll.u32 [#allocation5], 4
      %s1132 = int_to_ptr.vmem [resolvable:$true] %s1131
      %1134 = dma.vmem_to_hbm [thread:$0]  %s1132, 128, %s1, [#allocation4]
    $region17: #{tpu_custom_call.1} parent=1 // pred_fallthru
      _
    // Predicated region
    $region18: #{tpu_custom_call.1} parent=1 // pred_check
      _
    $region19: #{tpu_custom_call.1} parent=1 // pred_check_branch
      %1136 = sbr.rel (0) target = $region21
    $region20: #{tpu_custom_call.1} parent=1 // pred_region
      %1137 = dma.done [#allocation4], 128
    $region21: #{tpu_custom_call.1} parent=1 // pred_fallthru
      _
    %1138 = vsyncpa [#allocation3], 1
    %1139 = vsyncpa [#allocation4], 1

</llo_original>
